<compile_context>
chip_gen: v6e
topology: v6e:2x2x1
jax: 0.10.0
libtpu: 0.0.40
codegen_flags: <defaults>
</compile_context>

<pallas_src>
import functools

import jax
import jax.numpy as jnp
from jax import lax
from jax.experimental import pallas as pl
from jax.experimental.pallas import tpu as pltpu


_INV_SQRT2 = 0.7071067811865476        # 1/sqrt(2)   (exact erf GELU)
_SQRT_2_OVER_PI = 0.7978845608028654   # sqrt(2/pi)  (tanh GELU)
_GELU_C = 0.044715


def _block_kernel(x_ref, w_ref, b_ref, o_ref, *, slab_axis, exact_gelu):
    """One (tm, tn) output tile of  x + GELU(x @ W + b)."""
    tn = o_ref.shape[-1]
    x = x_ref[...]                                        # (tm, size_p) f32
    h = jnp.dot(x, w_ref[...], preferred_element_type=jnp.float32) + b_ref[...]
    if exact_gelu:
        # Matches torch.nn.GELU() default (erf).  Lowers to a VPU polynomial.
        g = 0.5 * h * (1.0 + lax.erf(h * jnp.float32(_INV_SQRT2)))
    else:
        # tanh approximation: the transcendental goes to the otherwise-idle
        # EUP slot, keeping this mem-bound kernel off the VALU critical path.
        u = jnp.float32(_SQRT_2_OVER_PI) * (h + jnp.float32(_GELU_C) * h * h * h)
        g = 0.5 * h * (1.0 + jnp.tanh(u))
    # Residual: slice the matching output-feature columns out of the resident
    # full-K x tile (start is a multiple of tn, itself a multiple of 128).
    col = pl.multiple_of(pl.program_id(slab_axis) * tn, tn)
    o_ref[...] = (x_ref[:, pl.ds(col, tn)] + g).astype(o_ref.dtype)


def _round_up(x, m):
    return (x + m - 1) // m * m


def _vmem_capacity_bytes():
    try:
        return int(pltpu.get_tpu_info().vmem_capacity_bytes)
    except Exception:
        return 64 * 1024 * 1024      # assume the smallest (v7x per-core VMEM)


def block_forward(x2, w, b, *, exact_gelu=False, tm_target=1024,
                  full_w_cap=2048, tn_cap=512):
    """x2: (M, size) f32, w: (size, size) stored as (in, out), b: (size,)."""
    M, size = x2.shape
    assert w.shape == (size, size) and b.shape == (size,)

    vmem_cap = _vmem_capacity_bytes()
    vmem_budget = min(48 * 1024 * 1024, (vmem_cap * 7) // 10)

    # Lane-dense feature dim (multiple of 128) -> unmasked vector stores.
    size_p = _round_up(size, 128)
    # Keep W fully VMEM-resident whenever reasonable; otherwise slab columns.
    tn = size_p if size_p <= full_w_cap else tn_cap
    nj = size_p // tn

    # Row tile: as large as possible (mem-bound), multiple of 8 (f32 sublane),
    # clamped to the (padded) row count and to the VMEM budget.
    tm = min(tm_target, _round_up(M, 8))

    def vmem_bytes(tm_):   # conservative: assume everything double-buffered
        return 2 * 4 * (tm_ * size_p + tm_ * tn + size_p * tn + tn)

    while tm > 8 and vmem_bytes(tm) > vmem_budget:
        tm //= 2
    tm = max(8, _round_up(tm, 8))

    M_p = _round_up(M, tm)
    ni = M_p // tm

    # Zero-pad ragged rows / features; padded rows are sliced off at the end,
    # padded feature columns stay exactly zero through the residual.
    x_p = x2 if (M_p, size_p) == (M, size) else jnp.pad(
        x2, ((0, M_p - M), (0, size_p - size)))
    w_p = w if size_p == size else jnp.pad(w, ((0, size_p - size),) * 2)
    b_p = (b if size_p == size else jnp.pad(b, (0, size_p - size))
           ).reshape(1, size_p)

    # Grid ordering: pick the order that re-streams the cheaper operand.
    #   rows-outer : x read once,  W re-read ni times (only when nj > 1)
    #   slabs-outer: W read once,  x re-read nj times
    rows_outer = (nj == 1) or (ni * size_p <= nj * M_p)
    if rows_outer:
        grid = (ni, nj)
        slab_axis = 1
        x_map = lambda i, j: (i, 0)
        w_map = lambda i, j: (0, j)
        o_map = lambda i, j: (i, j)
        dim_sem = ("parallel", "arbitrary")     # megacore shards rows only
        w_reads, x_reads = (1 if nj == 1 else ni), 1
    else:
        grid = (nj, ni)
        slab_axis = 0
        x_map = lambda j, i: (i, 0)
        w_map = lambda j, i: (0, j)
        o_map = lambda j, i: (i, j)
        dim_sem = ("arbitrary", "parallel")     # megacore shards rows only
        w_reads, x_reads = 1, nj
    b_map = w_map

    cost = pl.CostEstimate(
        flops=2 * M_p * size_p * size_p,
        transcendentals=M_p * size_p,
        bytes_accessed=4 * (x_reads * M_p * size_p          # x reads
                            + w_reads * size_p * size_p     # W reads
                            + size_p                        # bias read
                            + M_p * size_p),                # output writes
    )

    vmem_limit = min((vmem_cap * 8) // 10,
                     max(32 * 1024 * 1024, vmem_bytes(tm) + (8 << 20)))

    kernel = functools.partial(_block_kernel, slab_axis=slab_axis,
                               exact_gelu=exact_gelu)

    def build(single_buffer_w):
        # W / bias block indices are grid-constant when nj == 1: one VMEM
        # buffer is enough (halves the resident weight footprint).
        extra = (dict(pipeline_mode=pl.Buffered(1))
                 if (single_buffer_w and nj == 1) else {})
        return pl.pallas_call(
            kernel,
            out_shape=jax.ShapeDtypeStruct((M_p, size_p), x2.dtype),
            grid_spec=pltpu.PrefetchScalarGridSpec(
                num_scalar_prefetch=0,
                grid=grid,
                in_specs=[
                    pl.BlockSpec((tm, size_p), x_map),            # x (full K)
                    pl.BlockSpec((size_p, tn), w_map, **extra),   # weight slab
                    pl.BlockSpec((1, tn), b_map, **extra),        # bias slab
                ],
                out_specs=pl.BlockSpec((tm, tn), o_map),
            ),
            compiler_params=pltpu.CompilerParams(
                dimension_semantics=dim_sem,
                vmem_limit_bytes=int(vmem_limit),
            ),
            cost_estimate=cost,
        )

    try:
        out = build(True)(x_p, w_p, b_p)
    except Exception:
        # Fallback if pl.Buffered(1) is rejected by this jax / Mosaic version.
        out = build(False)(x_p, w_p, b_p)

    if (M_p, size_p) != (M, size):
        out = out[:M, :size]
    return out


def block_apply(x_bsd, w, b, *, exact_gelu=False):
    """x_bsd: (batch, seq, size) -> same shape, Block semantics."""
    batch, seq, size = x_bsd.shape
    y2 = block_forward(x_bsd.reshape(batch * seq, size), w, b,
                       exact_gelu=exact_gelu)
    return y2.reshape(batch, seq, size)


def _reference(x_bsd, w, b, *, exact_gelu=False):
    h = jnp.einsum("bsd,de->bse", x_bsd, w) + b
    if exact_gelu:
        g = 0.5 * h * (1.0 + lax.erf(h / jnp.sqrt(2.0)))
    else:
        u = _SQRT_2_OVER_PI * (h + _GELU_C * h ** 3)
        g = 0.5 * h * (1.0 + jnp.tanh(u))
    return x_bsd + g


def _make_params(key, size):
    # Deterministic synthetic "Linear(size, size)" params, stored (in, out).
    k_w, k_b = jax.random.split(key)
    bound = 1.0 / jnp.sqrt(size)
    w = jax.random.uniform(k_w, (size, size), minval=-bound, maxval=bound,
                           dtype=jnp.float32)
    b = jax.random.uniform(k_b, (size,), minval=-bound, maxval=bound,
                           dtype=jnp.float32)
    return w, b


if __name__ == "__main__":
    key = jax.random.PRNGKey(0)
    k_x, k_p, k_x2, k_p2 = jax.random.split(key, 4)

    # Primary small test consistent with the module: (batch, seq, hidden).
    batch, seq, size = 2, 8, 32
    x = jax.random.normal(k_x, (batch, seq, size), dtype=jnp.float32)
    w, b = _make_params(k_p, size)

    # Default (tanh-GELU, EUP-friendly) path.
    y = jax.block_until_ready(block_apply(x, w, b))
    assert y.shape == x.shape
    assert jnp.max(jnp.abs(y - _reference(x, w, b))) < 1e-5
    # The tanh approximation stays close to torch's exact erf GELU.
    assert jnp.max(jnp.abs(y - _reference(x, w, b, exact_gelu=True))) < 5e-3

    # Exact erf-GELU fidelity path (matches torch.nn.GELU() default).
    y_e = jax.block_until_ready(block_apply(x, w, b, exact_gelu=True))
    assert jnp.max(jnp.abs(y_e - _reference(x, w, b, exact_gelu=True))) < 1e-5

    # Ragged shape (non multiples of tile / 128) exercises the padding path.
    b2_, s2_, d2_ = 3, 5, 48
    x2 = jax.random.normal(k_x2, (b2_, s2_, d2_), dtype=jnp.float32)
    w2, bb2 = _make_params(k_p2, d2_)
    y2 = jax.block_until_ready(block_apply(x2, w2, bb2))
    assert jnp.max(jnp.abs(y2 - _reference(x2, w2, bb2))) < 1e-5

    print("KERNEL_OK")
</pallas_src>

<mosaic_0001>
module attributes {stable_mosaic.version = 11 : i64} {
  func.func @_block_kernel(%arg0: i32, %arg1: i32, %arg2: memref<16x128xf32, #tpu.memory_space<vmem>>, %arg3: memref<128x128xf32, #tpu.memory_space<vmem>>, %arg4: memref<1x128xf32, #tpu.memory_space<vmem>>, %arg5: memref<16x128xf32, #tpu.memory_space<vmem>>) attributes {dimension_semantics = [#tpu.dimension_semantics<parallel>, #tpu.dimension_semantics<arbitrary>], iteration_bounds = array<i64: 1, 1>, scalar_prefetch = 0 : i64, scratch_operands = 0 : i64, tpu.core_type = #tpu.core_type<tc>, window_params = [{transform_indices = @transform_0, window_bounds = array<i64: 16, 128>}, {pipeline_mode = #tpu.pipeline_mode<synchronous>, transform_indices = @transform_1, window_bounds = array<i64: 128, 128>}, {pipeline_mode = #tpu.pipeline_mode<synchronous>, transform_indices = @transform_2, window_bounds = array<i64: 1, 128>}, {transform_indices = @transform_3, window_bounds = array<i64: 16, 128>}]} {
    %c0 = arith.constant 0 : index
    %c0_0 = arith.constant 0 : index
    %0 = vector.load %arg2[%c0, %c0_0] : memref<16x128xf32, #tpu.memory_space<vmem>>, vector<16x128xf32>
    %c0_1 = arith.constant 0 : index
    %c0_2 = arith.constant 0 : index
    %1 = vector.load %arg3[%c0_1, %c0_2] : memref<128x128xf32, #tpu.memory_space<vmem>>, vector<128x128xf32>
    %cst = arith.constant dense<0.000000e+00> : vector<16x128xf32>
    %2 = tpu.matmul %0, %1, %cst {dimension_numbers = #tpu.dot_dimension_numbers<[1], [0], [0], [1], [0, 0, 1, 1], [], []>} : vector<16x128xf32>, vector<128x128xf32>, vector<16x128xf32> -> vector<16x128xf32>
    %c0_3 = arith.constant 0 : index
    %c0_4 = arith.constant 0 : index
    %3 = vector.load %arg4[%c0_3, %c0_4] : memref<1x128xf32, #tpu.memory_space<vmem>>, vector<1x128xf32>
    %4 = vector.broadcast %3 : vector<1x128xf32> to vector<16x128xf32>
    %5 = arith.addf %2, %4 : vector<16x128xf32>
    %cst_5 = arith.constant 4.471500e-02 : f32
    %6 = vector.broadcast %cst_5 : f32 to vector<16x128xf32>
    %7 = arith.mulf %6, %5 : vector<16x128xf32>
    %8 = arith.mulf %7, %5 : vector<16x128xf32>
    %9 = arith.mulf %8, %5 : vector<16x128xf32>
    %10 = arith.addf %5, %9 : vector<16x128xf32>
    %cst_6 = arith.constant 0.797884583 : f32
    %11 = vector.broadcast %cst_6 : f32 to vector<16x128xf32>
    %12 = arith.mulf %11, %10 : vector<16x128xf32>
    %cst_7 = arith.constant 5.000000e-01 : f32
    %13 = vector.broadcast %cst_7 : f32 to vector<16x128xf32>
    %14 = arith.mulf %13, %5 : vector<16x128xf32>
    %15 = math.tanh %12 : vector<16x128xf32>
    %cst_8 = arith.constant 1.000000e+00 : f32
    %16 = vector.broadcast %cst_8 : f32 to vector<16x128xf32>
    %17 = arith.addf %16, %15 : vector<16x128xf32>
    %18 = arith.mulf %14, %17 : vector<16x128xf32>
    %c128_i32 = arith.constant 128 : i32
    %19 = arith.muli %arg1, %c128_i32 : i32
    %20 = tpu.assume_multiple %19, 128 : i32
    %c0_9 = arith.constant 0 : index
    %21 = arith.index_cast %20 : i32 to index
    %22 = vector.load %arg2[%c0_9, %21] : memref<16x128xf32, #tpu.memory_space<vmem>>, vector<16x128xf32>
    %23 = arith.addf %22, %18 : vector<16x128xf32>
    %c0_10 = arith.constant 0 : index
    %c0_11 = arith.constant 0 : index
    %24 = vector.load %arg5[%c0_10, %c0_11] : memref<16x128xf32, #tpu.memory_space<vmem>>, vector<16x128xf32>
    tpu.vector_store %arg5[%c0_10, %c0_11], %23 {strides = array<i32>} : memref<16x128xf32, #tpu.memory_space<vmem>>, vector<16x128xf32>,
    return
  }
  func.func @transform_0(%arg0: i32, %arg1: i32) -> (i32, i32) {
    %c0_i32 = arith.constant 0 : i32
    %c0_i32_0 = arith.constant 0 : i32
    return %arg0, %c0_i32 : i32, i32
  }
  func.func @transform_1(%arg0: i32, %arg1: i32) -> (i32, i32) {
    %c0_i32 = arith.constant 0 : i32
    %c0_i32_0 = arith.constant 0 : i32
    return %c0_i32, %arg1 : i32, i32
  }
  func.func @transform_2(%arg0: i32, %arg1: i32) -> (i32, i32) {
    %c0_i32 = arith.constant 0 : i32
    %c0_i32_0 = arith.constant 0 : i32
    return %c0_i32, %arg1 : i32, i32
  }
  func.func @transform_3(%arg0: i32, %arg1: i32) -> (i32, i32) {
    %c0_i32 = arith.constant 0 : i32
    return %arg0, %arg1 : i32, i32
  }
}

module attributes {stable_mosaic.version = 11 : i64} {
  func.func @_block_kernel(%arg0: i32, %arg1: i32, %arg2: memref<16x128xf32, #tpu.memory_space<vmem>>, %arg3: memref<128x128xf32, #tpu.memory_space<vmem>>, %arg4: memref<1x128xf32, #tpu.memory_space<vmem>>, %arg5: memref<16x128xf32, #tpu.memory_space<vmem>>) attributes {dimension_semantics = [#tpu.dimension_semantics<parallel>, #tpu.dimension_semantics<arbitrary>], iteration_bounds = array<i64: 1, 1>, scalar_prefetch = 0 : i64, scratch_operands = 0 : i64, tpu.core_type = #tpu.core_type<tc>, window_params = [{transform_indices = @transform_0, window_bounds = array<i64: 16, 128>}, {transform_indices = @transform_1, window_bounds = array<i64: 128, 128>}, {transform_indices = @transform_2, window_bounds = array<i64: 1, 128>}, {transform_indices = @transform_3, window_bounds = array<i64: 16, 128>}]} {
    %c0 = arith.constant 0 : index
    %c0_0 = arith.constant 0 : index
    %0 = vector.load %arg2[%c0, %c0_0] : memref<16x128xf32, #tpu.memory_space<vmem>>, vector<16x128xf32>
    %c0_1 = arith.constant 0 : index
    %c0_2 = arith.constant 0 : index
    %1 = vector.load %arg3[%c0_1, %c0_2] : memref<128x128xf32, #tpu.memory_space<vmem>>, vector<128x128xf32>
    %cst = arith.constant dense<0.000000e+00> : vector<16x128xf32>
    %2 = tpu.matmul %0, %1, %cst {dimension_numbers = #tpu.dot_dimension_numbers<[1], [0], [0], [1], [0, 0, 1, 1], [], []>} : vector<16x128xf32>, vector<128x128xf32>, vector<16x128xf32> -> vector<16x128xf32>
    %c0_3 = arith.constant 0 : index
    %c0_4 = arith.constant 0 : index
    %3 = vector.load %arg4[%c0_3, %c0_4] : memref<1x128xf32, #tpu.memory_space<vmem>>, vector<1x128xf32>
    %4 = vector.broadcast %3 : vector<1x128xf32> to vector<16x128xf32>
    %5 = arith.addf %2, %4 : vector<16x128xf32>
    %cst_5 = arith.constant 4.471500e-02 : f32
    %6 = vector.broadcast %cst_5 : f32 to vector<16x128xf32>
    %7 = arith.mulf %6, %5 : vector<16x128xf32>
    %8 = arith.mulf %7, %5 : vector<16x128xf32>
    %9 = arith.mulf %8, %5 : vector<16x128xf32>
    %10 = arith.addf %5, %9 : vector<16x128xf32>
    %cst_6 = arith.constant 0.797884583 : f32
    %11 = vector.broadcast %cst_6 : f32 to vector<16x128xf32>
    %12 = arith.mulf %11, %10 : vector<16x128xf32>
    %cst_7 = arith.constant 5.000000e-01 : f32
    %13 = vector.broadcast %cst_7 : f32 to vector<16x128xf32>
    %14 = arith.mulf %13, %5 : vector<16x128xf32>
    %15 = math.tanh %12 : vector<16x128xf32>
    %cst_8 = arith.constant 1.000000e+00 : f32
    %16 = vector.broadcast %cst_8 : f32 to vector<16x128xf32>
    %17 = arith.addf %16, %15 : vector<16x128xf32>
    %18 = arith.mulf %14, %17 : vector<16x128xf32>
    %c128_i32 = arith.constant 128 : i32
    %19 = arith.muli %arg1, %c128_i32 : i32
    %20 = tpu.assume_multiple %19, 128 : i32
    %c0_9 = arith.constant 0 : index
    %21 = arith.index_cast %20 : i32 to index
    %22 = vector.load %arg2[%c0_9, %21] : memref<16x128xf32, #tpu.memory_space<vmem>>, vector<16x128xf32>
    %23 = arith.addf %22, %18 : vector<16x128xf32>
    %c0_10 = arith.constant 0 : index
    %c0_11 = arith.constant 0 : index
    %24 = vector.load %arg5[%c0_10, %c0_11] : memref<16x128xf32, #tpu.memory_space<vmem>>, vector<16x128xf32>
    tpu.vector_store %arg5[%c0_10, %c0_11], %23 {strides = array<i32>} : memref<16x128xf32, #tpu.memory_space<vmem>>, vector<16x128xf32>,
    return
  }
  func.func @transform_0(%arg0: i32, %arg1: i32) -> (i32, i32) {
    %c0_i32 = arith.constant 0 : i32
    %c0_i32_0 = arith.constant 0 : i32
    return %arg0, %c0_i32 : i32, i32
  }
  func.func @transform_1(%arg0: i32, %arg1: i32) -> (i32, i32) {
    %c0_i32 = arith.constant 0 : i32
    %c0_i32_0 = arith.constant 0 : i32
    return %c0_i32, %arg1 : i32, i32
  }
  func.func @transform_2(%arg0: i32, %arg1: i32) -> (i32, i32) {
    %c0_i32 = arith.constant 0 : i32
    %c0_i32_0 = arith.constant 0 : i32
    return %c0_i32, %arg1 : i32, i32
  }
  func.func @transform_3(%arg0: i32, %arg1: i32) -> (i32, i32) {
    %c0_i32 = arith.constant 0 : i32
    return %arg0, %arg1 : i32, i32
  }
}

</mosaic_0001>

<llo_original>
// kernel: tpu_custom_call.1
$region0: #{tpu_custom_call.1}
  #allocation0 [shape = 'u32[]', space=smem, size = 0x4, offset = 0x4, fixed_abs, tag = 'smem constant byte address 0x4 - core index']
  #allocation1 [shape = 'u32[144,128]{1,0:T(1,128)}', space=vmem, size = 0x12000, scoped, tag = 'internal scratch']
  %s0 = inlined_call_operand.hbm [shape: f32[16,128], index: 0, kind: input, shape index: {}]
  %s1 = inlined_call_operand.hbm [shape: f32[128,128], index: 1, kind: input, shape index: {}]
  %s2 = inlined_call_operand.vmem [shape: f32[1,128], index: 2, kind: input, shape index: {}]
  %s3 = inlined_call_operand.hbm [shape: f32[16,128], index: 3, kind: output, shape index: {}]
  %s4 = sld [smem:[#allocation0]]
  $region30: #{tpu_custom_call.1} parent=0
    _
  %s6 = ssub.s32 1, %s4
  %s7 = scalar_select 0, %s6, %s4
  $region1: #{tpu_custom_call.1} parent=0
    #allocation2 [shape = 'u8[8192]{0}', space=vmem, size = 0x2000, scoped, tag = 'input window, operand 0, single buffered']
    #allocation3 [shape = 's32[1]{0}', space=sflag, size = 0x4, scoped, tag = 'scoped memory for tpu_custom_call.1']
    #allocation4 [shape = 's32[1]{0}', space=sflag, size = 0x4, scoped, tag = 'scoped memory for tpu_custom_call.1']
    #allocation5 [shape = 'u8[65536]{0}', space=vmem, size = 0x10000, scoped, tag = 'input window, operand 1, single buffered']
    #allocation6 [shape = 's32[1]{0}', space=sflag, size = 0x4, scoped, tag = 'scoped memory for tpu_custom_call.1']
    #allocation7 [shape = 'u8[8192]{0}', space=vmem, size = 0x2000, scoped, tag = 'output window, operand 0, single buffered']
    %8 = vsyncpa [#allocation3], 0
    %9 = vsyncpa [#allocation6], 0
    %10 = vsyncpa [#allocation4], 0
    // Predicated region
    $region2: #{tpu_custom_call.1} parent=1 // pred_check
      _
    $region3: #{tpu_custom_call.1} parent=1 // pred_check_branch
      %12 = sbr.rel (0) target = $region5
    $region4: #{tpu_custom_call.1} parent=1 // pred_region
      %s14 = ssub.s32 256, 256
      %15 = vsyncadd [#allocation3], %s14
      %s16 = sshll.u32 [#allocation2], 4
      %s17 = int_to_ptr.vmem [resolvable:$true] %s16
      %22 = dma.hbm_to_vmem [thread:$0]  %s0, 256, %s17, [#allocation3], 128, 128, 8
    $region5: #{tpu_custom_call.1} parent=1 // pred_fallthru
      _
    // Predicated region
    $region6: #{tpu_custom_call.1} parent=1 // pred_check
      _
    $region7: #{tpu_custom_call.1} parent=1 // pred_check_branch
      %24 = sbr.rel (0) target = $region9
    $region8: #{tpu_custom_call.1} parent=1 // pred_region
      %s26 = ssub.s32 2048, 2048
      %27 = vsyncadd [#allocation6], %s26
      %s28 = sshll.u32 [#allocation5], 4
      %s29 = int_to_ptr.vmem [resolvable:$true] %s28
      %34 = dma.hbm_to_vmem [thread:$0]  %s1, 2048, %s29, [#allocation6], 128, 128, 8
    $region9: #{tpu_custom_call.1} parent=1 // pred_fallthru
      _
    // Predicated region
    $region10: #{tpu_custom_call.1} parent=1 // pred_check
      _
    $region11: #{tpu_custom_call.1} parent=1 // pred_check_branch
      %36 = sbr.rel (0) target = $region13
    $region12: #{tpu_custom_call.1} parent=1 // pred_region
      _
    $region13: #{tpu_custom_call.1} parent=1 // pred_fallthru
      _
    // Predicated region
    $region14: #{tpu_custom_call.1} parent=1 // pred_check
      _
    $region15: #{tpu_custom_call.1} parent=1 // pred_check_branch
      %38 = sbr.rel (0) target = $region17
    $region16: #{tpu_custom_call.1} parent=1 // pred_region
      %39 = dma.done [#allocation3], 256
    $region17: #{tpu_custom_call.1} parent=1 // pred_fallthru
      _
    // Predicated region
    $region18: #{tpu_custom_call.1} parent=1 // pred_check
      _
    $region19: #{tpu_custom_call.1} parent=1 // pred_check_branch
      %41 = sbr.rel (0) target = $region21
    $region20: #{tpu_custom_call.1} parent=1 // pred_region
      %42 = dma.done [#allocation6], 2048
    $region21: #{tpu_custom_call.1} parent=1 // pred_fallthru
      _
    %v43 = vld [vmem:[#allocation2] sm:$0xff]
    %v44 = vld [vmem:[#allocation2 + $0x8] sm:$0xff]
    %v45 = vld [vmem:[#allocation5] sm:$0xff]
    %v46 = vld [vmem:[#allocation5 + $0x8] sm:$0xff]
    %v47 = vld [vmem:[#allocation5 + $0x10] sm:$0xff]
    %v48 = vld [vmem:[#allocation5 + $0x18] sm:$0xff]
    %v49 = vld [vmem:[#allocation5 + $0x20] sm:$0xff]
    %v50 = vld [vmem:[#allocation5 + $0x28] sm:$0xff]
    %v51 = vld [vmem:[#allocation5 + $0x30] sm:$0xff]
    %v52 = vld [vmem:[#allocation5 + $0x38] sm:$0xff]
    %v53 = vld [vmem:[#allocation5 + $0x40] sm:$0xff]
    %v54 = vld [vmem:[#allocation5 + $0x48] sm:$0xff]
    %v55 = vld [vmem:[#allocation5 + $0x50] sm:$0xff]
    %v56 = vld [vmem:[#allocation5 + $0x58] sm:$0xff]
    %v57 = vld [vmem:[#allocation5 + $0x60] sm:$0xff]
    %v58 = vld [vmem:[#allocation5 + $0x68] sm:$0xff]
    %v59 = vld [vmem:[#allocation5 + $0x70] sm:$0xff]
    %v60 = vld [vmem:[#allocation5 + $0x78] sm:$0xff]
    %v61 = vld [vmem:[%s2] sm:$0x1]
    %v63 = vlaneseq
    %v64 = vshrl.u32 %v63, 7
    %v65 = vsub.s32 0, %v64
    %v66 = vrot.slane %v61, %v65
    %68 = vmatprep.subr.mxu0 0.0
    %69 = vmatpush1.msra.mxu0 %v60
    %70 = vmatprep.subr.mxu0 0.0
    %71 = vmatpush1.msra.mxu0 %v59
    %72 = vmatprep.subr.mxu0 0.0
    %73 = vmatpush1.msra.mxu0 %v58
    %74 = vmatprep.subr.mxu0 0.0
    %75 = vmatpush1.msra.mxu0 %v57
    %76 = vmatprep.subr.mxu0 0.0
    %77 = vmatpush1.msra.mxu0 %v56
    %78 = vmatprep.subr.mxu0 0.0
    %79 = vmatpush1.msra.mxu0 %v55
    %80 = vmatprep.subr.mxu0 0.0
    %81 = vmatpush1.msra.mxu0 %v54
    %82 = vmatprep.subr.mxu0 0.0
    %83 = vmatpush1.msra.mxu0 %v53
    %84 = vmatprep.subr.mxu0 0.0
    %85 = vmatpush1.msra.mxu0 %v52
    %86 = vmatprep.subr.mxu0 0.0
    %87 = vmatpush1.msra.mxu0 %v51
    %88 = vmatprep.subr.mxu0 0.0
    %89 = vmatpush1.msra.mxu0 %v50
    %90 = vmatprep.subr.mxu0 0.0
    %91 = vmatpush1.msra.mxu0 %v49
    %92 = vmatprep.subr.mxu0 0.0
    %93 = vmatpush1.msra.mxu0 %v48
    %94 = vmatprep.subr.mxu0 0.0
    %95 = vmatpush1.msra.mxu0 %v47
    %96 = vmatprep.subr.mxu0 0.0
    %97 = vmatpush1.msra.mxu0 %v46
    %98 = vmatprep.subr.mxu0 0.0
    %99 = vmatpush1.msra.mxu0 %v45
    %100 = vmatprep.subr.mxu0 0.0
    %101 = vmatpush2.msra.mxu0 0.0
    %102 = vmatprep.subr.mxu0 0.0
    %103 = vmatpush2.msra.mxu0 0.0
    %104 = vmatprep.subr.mxu0 0.0
    %105 = vmatpush2.msra.mxu0 0.0
    %106 = vmatprep.subr.mxu0 0.0
    %107 = vmatpush2.msra.mxu0 0.0
    %108 = vmatprep.subr.mxu0 0.0
    %109 = vmatpush2.msra.mxu0 0.0
    %110 = vmatprep.subr.mxu0 0.0
    %111 = vmatpush2.msra.mxu0 0.0
    %112 = vmatprep.subr.mxu0 0.0
    %113 = vmatpush2.msra.mxu0 0.0
    %114 = vmatprep.subr.mxu0 0.0
    %115 = vmatpush2.msra.mxu0 0.0
    %116 = vmatprep.subr.mxu0 0.0
    %117 = vmatpush2.msra.mxu0 0.0
    %118 = vmatprep.subr.mxu0 0.0
    %119 = vmatpush2.msra.mxu0 0.0
    %120 = vmatprep.subr.mxu0 0.0
    %121 = vmatpush2.msra.mxu0 0.0
    %122 = vmatprep.subr.mxu0 0.0
    %123 = vmatpush2.msra.mxu0 0.0
    %124 = vmatprep.subr.mxu0 0.0
    %125 = vmatpush2.msra.mxu0 0.0
    %126 = vmatprep.subr.mxu0 0.0
    %127 = vmatpush2.msra.mxu0 0.0
    %128 = vmatprep.subr.mxu0 0.0
    %129 = vmatpush2.msra.mxu0 0.0
    %130 = vmatprep.subr.mxu0 0.0
    %131 = vmatpush2.msra.mxu0 0.0
    %132 = vmatprep.mubr.f32.mxu0 0.0
    %133 = vmatmul.mubr.f32.gmra.mxu0 %v43
    %v134 = vpop.f32.mrf.mxu0
    %v135 = vadd.f32 %v66, %v134
    %v136 = vpop.f32.mrf.mxu0
    %137 = vmatprep.mubr.f32.mxu0 0.0
    %138 = vmatmul.mubr.f32.gmra.mxu0 %v44
    %v139 = vpop.f32.mrf.mxu0
    %v140 = vadd.f32 %v66, %v139
    %v141 = vpop.f32.mrf.mxu0
    %142 = vdwg.mxu0
    %v143 = vmul.f32 %v135, 0.044715
    %v144 = vmul.f32 %v140, 0.044715
    %v145 = vmul.f32 %v143, %v135
    %v146 = vmul.f32 %v144, %v140
    %v147 = vmul.f32 %v145, %v135
    %v148 = vmul.f32 %v146, %v140
    %v149 = vadd.f32 %v135, %v147
    %v150 = vadd.f32 %v140, %v148
    %v151 = vmul.f32 %v149, 0.7978846
    %v152 = vmul.f32 %v150, 0.7978846
    %v153 = vmul.f32 %v135, 0.5
    %v154 = vmul.f32 %v140, 0.5
    %v155 = vtanh.pop %v151
    %v156 = vtanh.pop %v152
    %v157 = vadd.f32 %v155, 1.0
    %v158 = vadd.f32 %v156, 1.0
    %v159 = vmul.f32 %v153, %v157
    %v160 = vmul.f32 %v154, %v158
    %s161 = smul.u32 0, 128
    %s162 = sshra.s32 %s161, 7
    %s163 = sand.u32 %s161, 127
    %s164 = scalar_lea.vmem [#allocation2], %s162
    %v165 = vld [vmem:[%s164] sm:$0xff]
    %v166 = vld [vmem:[%s164 + $0x8] sm:$0xff]
    %v167 = vadd.f32 %v165, %v159
    %v168 = vadd.f32 %v166, %v160
    %169 = vst [vmem:[#allocation7] sm:$0xff] %v167
    %170 = vst [vmem:[#allocation7 + $0x8] sm:$0xff] %v168
    // Predicated region
    $region22: #{tpu_custom_call.1} parent=1 // pred_check
      _
    $region23: #{tpu_custom_call.1} parent=1 // pred_check_branch
      %172 = sbr.rel (0) target = $region25
    $region24: #{tpu_custom_call.1} parent=1 // pred_region
      %s174 = ssub.s32 256, 256
      %175 = vsyncadd [#allocation4], %s174
      %s176 = sshll.u32 [#allocation7], 4
      %s177 = int_to_ptr.vmem [resolvable:$true] %s176
      %182 = dma.vmem_to_hbm [thread:$0]  %s177, 256, %s3, [#allocation4], 128, 128, 8
    $region25: #{tpu_custom_call.1} parent=1 // pred_fallthru
      _
    // Predicated region
    $region26: #{tpu_custom_call.1} parent=1 // pred_check
      _
    $region27: #{tpu_custom_call.1} parent=1 // pred_check_branch
      %184 = sbr.rel (0) target = $region29
    $region28: #{tpu_custom_call.1} parent=1 // pred_region
      %185 = dma.done [#allocation4], 256
    $region29: #{tpu_custom_call.1} parent=1 // pred_fallthru
      _
    %186 = vsyncpa [#allocation3], 1
    %187 = vsyncpa [#allocation6], 1
    %188 = vsyncpa [#allocation4], 1

// kernel: tpu_custom_call.1
$region0: #{tpu_custom_call.1}
  #allocation0 [shape = 'u32[]', space=smem, size = 0x4, offset = 0x4, fixed_abs, tag = 'smem constant byte address 0x4 - core index']
  #allocation1 [shape = 'u32[144,128]{1,0:T(1,128)}', space=vmem, size = 0x12000, scoped, tag = 'internal scratch']
  %s0 = inlined_call_operand.hbm [shape: f32[16,128], index: 0, kind: input, shape index: {}]
  %s1 = inlined_call_operand.hbm [shape: f32[128,128], index: 1, kind: input, shape index: {}]
  %s2 = inlined_call_operand.vmem [shape: f32[1,128], index: 2, kind: input, shape index: {}]
  %s3 = inlined_call_operand.hbm [shape: f32[16,128], index: 3, kind: output, shape index: {}]
  %s4 = sld [smem:[#allocation0]]
  $region30: #{tpu_custom_call.1} parent=0
    _
  %s6 = ssub.s32 1, %s4
  %s7 = scalar_select 0, %s6, %s4
  $region1: #{tpu_custom_call.1} parent=0
    #allocation2 [shape = 'u8[8192]{0}', space=vmem, size = 0x2000, scoped, tag = 'input window, operand 0, single buffered']
    #allocation3 [shape = 's32[1]{0}', space=sflag, size = 0x4, scoped, tag = 'scoped memory for tpu_custom_call.1']
    #allocation4 [shape = 's32[1]{0}', space=sflag, size = 0x4, scoped, tag = 'scoped memory for tpu_custom_call.1']
    #allocation5 [shape = 'u8[65536]{0}', space=vmem, size = 0x10000, scoped, tag = 'input window, operand 1, single buffered']
    #allocation6 [shape = 's32[1]{0}', space=sflag, size = 0x4, scoped, tag = 'scoped memory for tpu_custom_call.1']
    #allocation7 [shape = 'u8[8192]{0}', space=vmem, size = 0x2000, scoped, tag = 'output window, operand 0, single buffered']
    %8 = vsyncpa [#allocation3], 0
    %9 = vsyncpa [#allocation6], 0
    %10 = vsyncpa [#allocation4], 0
    // Predicated region
    $region2: #{tpu_custom_call.1} parent=1 // pred_check
      _
    $region3: #{tpu_custom_call.1} parent=1 // pred_check_branch
      %12 = sbr.rel (0) target = $region5
    $region4: #{tpu_custom_call.1} parent=1 // pred_region
      %s14 = ssub.s32 256, 256
      %15 = vsyncadd [#allocation3], %s14
      %s16 = sshll.u32 [#allocation2], 4
      %s17 = int_to_ptr.vmem [resolvable:$true] %s16
      %22 = dma.hbm_to_vmem [thread:$0]  %s0, 256, %s17, [#allocation3], 128, 128, 8
    $region5: #{tpu_custom_call.1} parent=1 // pred_fallthru
      _
    // Predicated region
    $region6: #{tpu_custom_call.1} parent=1 // pred_check
      _
    $region7: #{tpu_custom_call.1} parent=1 // pred_check_branch
      %24 = sbr.rel (0) target = $region9
    $region8: #{tpu_custom_call.1} parent=1 // pred_region
      %s26 = ssub.s32 2048, 2048
      %27 = vsyncadd [#allocation6], %s26
      %s28 = sshll.u32 [#allocation5], 4
      %s29 = int_to_ptr.vmem [resolvable:$true] %s28
      %34 = dma.hbm_to_vmem [thread:$0]  %s1, 2048, %s29, [#allocation6], 128, 128, 8
    $region9: #{tpu_custom_call.1} parent=1 // pred_fallthru
      _
    // Predicated region
    $region10: #{tpu_custom_call.1} parent=1 // pred_check
      _
    $region11: #{tpu_custom_call.1} parent=1 // pred_check_branch
      %36 = sbr.rel (0) target = $region13
    $region12: #{tpu_custom_call.1} parent=1 // pred_region
      _
    $region13: #{tpu_custom_call.1} parent=1 // pred_fallthru
      _
    // Predicated region
    $region14: #{tpu_custom_call.1} parent=1 // pred_check
      _
    $region15: #{tpu_custom_call.1} parent=1 // pred_check_branch
      %38 = sbr.rel (0) target = $region17
    $region16: #{tpu_custom_call.1} parent=1 // pred_region
      %39 = dma.done [#allocation3], 256
    $region17: #{tpu_custom_call.1} parent=1 // pred_fallthru
      _
    // Predicated region
    $region18: #{tpu_custom_call.1} parent=1 // pred_check
      _
    $region19: #{tpu_custom_call.1} parent=1 // pred_check_branch
      %41 = sbr.rel (0) target = $region21
    $region20: #{tpu_custom_call.1} parent=1 // pred_region
      %42 = dma.done [#allocation6], 2048
    $region21: #{tpu_custom_call.1} parent=1 // pred_fallthru
      _
    %v43 = vld [vmem:[#allocation2] sm:$0xff]
    %v44 = vld [vmem:[#allocation2 + $0x8] sm:$0xff]
    %v45 = vld [vmem:[#allocation5] sm:$0xff]
    %v46 = vld [vmem:[#allocation5 + $0x8] sm:$0xff]
    %v47 = vld [vmem:[#allocation5 + $0x10] sm:$0xff]
    %v48 = vld [vmem:[#allocation5 + $0x18] sm:$0xff]
    %v49 = vld [vmem:[#allocation5 + $0x20] sm:$0xff]
    %v50 = vld [vmem:[#allocation5 + $0x28] sm:$0xff]
    %v51 = vld [vmem:[#allocation5 + $0x30] sm:$0xff]
    %v52 = vld [vmem:[#allocation5 + $0x38] sm:$0xff]
    %v53 = vld [vmem:[#allocation5 + $0x40] sm:$0xff]
    %v54 = vld [vmem:[#allocation5 + $0x48] sm:$0xff]
    %v55 = vld [vmem:[#allocation5 + $0x50] sm:$0xff]
    %v56 = vld [vmem:[#allocation5 + $0x58] sm:$0xff]
    %v57 = vld [vmem:[#allocation5 + $0x60] sm:$0xff]
    %v58 = vld [vmem:[#allocation5 + $0x68] sm:$0xff]
    %v59 = vld [vmem:[#allocation5 + $0x70] sm:$0xff]
    %v60 = vld [vmem:[#allocation5 + $0x78] sm:$0xff]
    %v61 = vld [vmem:[%s2] sm:$0x1]
    %v63 = vlaneseq
    %v64 = vshrl.u32 %v63, 7
    %v65 = vsub.s32 0, %v64
    %v66 = vrot.slane %v61, %v65
    %68 = vmatprep.subr.mxu0 0.0
    %69 = vmatpush1.msra.mxu0 %v60
    %70 = vmatprep.subr.mxu0 0.0
    %71 = vmatpush1.msra.mxu0 %v59
    %72 = vmatprep.subr.mxu0 0.0
    %73 = vmatpush1.msra.mxu0 %v58
    %74 = vmatprep.subr.mxu0 0.0
    %75 = vmatpush1.msra.mxu0 %v57
    %76 = vmatprep.subr.mxu0 0.0
    %77 = vmatpush1.msra.mxu0 %v56
    %78 = vmatprep.subr.mxu0 0.0
    %79 = vmatpush1.msra.mxu0 %v55
    %80 = vmatprep.subr.mxu0 0.0
    %81 = vmatpush1.msra.mxu0 %v54
    %82 = vmatprep.subr.mxu0 0.0
    %83 = vmatpush1.msra.mxu0 %v53
    %84 = vmatprep.subr.mxu0 0.0
    %85 = vmatpush1.msra.mxu0 %v52
    %86 = vmatprep.subr.mxu0 0.0
    %87 = vmatpush1.msra.mxu0 %v51
    %88 = vmatprep.subr.mxu0 0.0
    %89 = vmatpush1.msra.mxu0 %v50
    %90 = vmatprep.subr.mxu0 0.0
    %91 = vmatpush1.msra.mxu0 %v49
    %92 = vmatprep.subr.mxu0 0.0
    %93 = vmatpush1.msra.mxu0 %v48
    %94 = vmatprep.subr.mxu0 0.0
    %95 = vmatpush1.msra.mxu0 %v47
    %96 = vmatprep.subr.mxu0 0.0
    %97 = vmatpush1.msra.mxu0 %v46
    %98 = vmatprep.subr.mxu0 0.0
    %99 = vmatpush1.msra.mxu0 %v45
    %100 = vmatprep.subr.mxu0 0.0
    %101 = vmatpush2.msra.mxu0 0.0
    %102 = vmatprep.subr.mxu0 0.0
    %103 = vmatpush2.msra.mxu0 0.0
    %104 = vmatprep.subr.mxu0 0.0
    %105 = vmatpush2.msra.mxu0 0.0
    %106 = vmatprep.subr.mxu0 0.0
    %107 = vmatpush2.msra.mxu0 0.0
    %108 = vmatprep.subr.mxu0 0.0
    %109 = vmatpush2.msra.mxu0 0.0
    %110 = vmatprep.subr.mxu0 0.0
    %111 = vmatpush2.msra.mxu0 0.0
    %112 = vmatprep.subr.mxu0 0.0
    %113 = vmatpush2.msra.mxu0 0.0
    %114 = vmatprep.subr.mxu0 0.0
    %115 = vmatpush2.msra.mxu0 0.0
    %116 = vmatprep.subr.mxu0 0.0
    %117 = vmatpush2.msra.mxu0 0.0
    %118 = vmatprep.subr.mxu0 0.0
    %119 = vmatpush2.msra.mxu0 0.0
    %120 = vmatprep.subr.mxu0 0.0
    %121 = vmatpush2.msra.mxu0 0.0
    %122 = vmatprep.subr.mxu0 0.0
    %123 = vmatpush2.msra.mxu0 0.0
    %124 = vmatprep.subr.mxu0 0.0
    %125 = vmatpush2.msra.mxu0 0.0
    %126 = vmatprep.subr.mxu0 0.0
    %127 = vmatpush2.msra.mxu0 0.0
    %128 = vmatprep.subr.mxu0 0.0
    %129 = vmatpush2.msra.mxu0 0.0
    %130 = vmatprep.subr.mxu0 0.0
    %131 = vmatpush2.msra.mxu0 0.0
    %132 = vmatprep.mubr.f32.mxu0 0.0
    %133 = vmatmul.mubr.f32.gmra.mxu0 %v43
    %v134 = vpop.f32.mrf.mxu0
    %v135 = vadd.f32 %v66, %v134
    %v136 = vpop.f32.mrf.mxu0
    %137 = vmatprep.mubr.f32.mxu0 0.0
    %138 = vmatmul.mubr.f32.gmra.mxu0 %v44
    %v139 = vpop.f32.mrf.mxu0
    %v140 = vadd.f32 %v66, %v139
    %v141 = vpop.f32.mrf.mxu0
    %142 = vdwg.mxu0
    %v143 = vmul.f32 %v135, 0.044715
    %v144 = vmul.f32 %v140, 0.044715
    %v145 = vmul.f32 %v143, %v135
    %v146 = vmul.f32 %v144, %v140
    %v147 = vmul.f32 %v145, %v135
    %v148 = vmul.f32 %v146, %v140
    %v149 = vadd.f32 %v135, %v147
    %v150 = vadd.f32 %v140, %v148
    %v151 = vmul.f32 %v149, 0.7978846
    %v152 = vmul.f32 %v150, 0.7978846
    %v153 = vmul.f32 %v135, 0.5
    %v154 = vmul.f32 %v140, 0.5
    %v155 = vtanh.pop %v151
    %v156 = vtanh.pop %v152
    %v157 = vadd.f32 %v155, 1.0
    %v158 = vadd.f32 %v156, 1.0
    %v159 = vmul.f32 %v153, %v157
    %v160 = vmul.f32 %v154, %v158
    %s161 = smul.u32 0, 128
    %s162 = sshra.s32 %s161, 7
    %s163 = sand.u32 %s161, 127
    %s164 = scalar_lea.vmem [#allocation2], %s162
    %v165 = vld [vmem:[%s164] sm:$0xff]
    %v166 = vld [vmem:[%s164 + $0x8] sm:$0xff]
    %v167 = vadd.f32 %v165, %v159
    %v168 = vadd.f32 %v166, %v160
    %169 = vst [vmem:[#allocation7] sm:$0xff] %v167
    %170 = vst [vmem:[#allocation7 + $0x8] sm:$0xff] %v168
    // Predicated region
    $region22: #{tpu_custom_call.1} parent=1 // pred_check
      _
    $region23: #{tpu_custom_call.1} parent=1 // pred_check_branch
      %172 = sbr.rel (0) target = $region25
    $region24: #{tpu_custom_call.1} parent=1 // pred_region
      %s174 = ssub.s32 256, 256
      %175 = vsyncadd [#allocation4], %s174
      %s176 = sshll.u32 [#allocation7], 4
      %s177 = int_to_ptr.vmem [resolvable:$true] %s176
      %182 = dma.vmem_to_hbm [thread:$0]  %s177, 256, %s3, [#allocation4], 128, 128, 8
    $region25: #{tpu_custom_call.1} parent=1 // pred_fallthru
      _
    // Predicated region
    $region26: #{tpu_custom_call.1} parent=1 // pred_check
      _
    $region27: #{tpu_custom_call.1} parent=1 // pred_check_branch
      %184 = sbr.rel (0) target = $region29
    $region28: #{tpu_custom_call.1} parent=1 // pred_region
      %185 = dma.done [#allocation4], 256
    $region29: #{tpu_custom_call.1} parent=1 // pred_fallthru
      _
    %186 = vsyncpa [#allocation3], 1
    %187 = vsyncpa [#allocation6], 1
    %188 = vsyncpa [#allocation4], 1

</llo_original>
